<compile_context>
chip_gen: v6e
topology: v6e:2x2x1
jax: 0.10.0
libtpu: 0.0.40
codegen_flags: <defaults>
</compile_context>

<pallas_src>
import functools
import math

import jax
import jax.numpy as jnp
import numpy as np
from jax import lax
from jax.experimental import pallas as pl
from jax.experimental.pallas import tpu as pltpu

EPS = 1e-5          # nn.BatchNorm1d default eps
LANE = 128
NUM_CORE_SPLITS = 2  # leading "parallel" grid axis (v7x has 2 TensorCores)


# ----------------------------------------------------------------------------
# Kernel 1: conv-as-matmul + bias + ReLU + incremental global-average-pool sum.
#   grid = (core_split, spatial_tile)   ("parallel", "arbitrary")
#   patches: (B, T, KP) bf16   w: (KP, F) bf16   b: (1, F) f32
#   part:    (B, F) f32 partial pool sum per core split (block of (NC, B, F))
#   acc:     (B, F) f32 VMEM scratch accumulator
# ----------------------------------------------------------------------------
def _conv_pool_kernel(patches_ref, w_ref, b_ref, part_ref, acc_ref):
    s = pl.program_id(1)

    @pl.when(s == 0)
    def _init():
        acc_ref[...] = jnp.zeros_like(acc_ref)

    B, T, KP = patches_ref.shape
    p = patches_ref[...].reshape(B * T, KP)                          # lane-dense LHS
    z = jnp.dot(p, w_ref[...], preferred_element_type=jnp.float32)  # MXU, f32 acc
    z = jnp.maximum(z + b_ref[...], 0.0)                             # bias + ReLU
    acc_ref[...] += z.reshape(B, T, -1).sum(axis=1)                  # incremental GAP

    @pl.when(s == pl.num_programs(1) - 1)
    def _store():
        part_ref[...] = acc_ref[...]


# ----------------------------------------------------------------------------
# Kernel 2 (tiny, runs once): combine per-core partial sums -> mean pool ->
# Linear -> BatchNorm1d (training-mode batch statistics).
#   part: (NC, B, F) f32   lw: (F, E) f32   hp: (3, E) f32 = [lin_b; gamma; beta]
# ----------------------------------------------------------------------------
def _head_kernel(part_ref, lw_ref, hp_ref, out_ref, *, inv_hw):
    feats = part_ref[...].sum(axis=0) * inv_hw                       # (B, F) pooled
    hp = hp_ref[...]
    # lin_b is mathematically cancelled by the BN mean subtraction; kept for
    # exact parameter semantics (and in case eval-mode BN is added later).
    y = jnp.dot(feats, lw_ref[...], preferred_element_type=jnp.float32) + hp[0:1, :]
    mu = jnp.mean(y, axis=0, keepdims=True)
    var = jnp.mean((y - mu) ** 2, axis=0, keepdims=True)
    out_ref[...] = hp[1:2, :] * (y - mu) * lax.rsqrt(var + EPS) + hp[2:3, :]


# ----------------------------------------------------------------------------
# Wrapper: layout glue (NCHW->NHWC, bf16 cast, im2col, K pad) + pallas_call.
# ----------------------------------------------------------------------------
def _im2col_3x3(x_nhwc):
    """(B,H,W,C) -> (B, H*W, 9*C) patches for a 3x3 / stride-1 / pad-1 conv."""
    B, H, W, C = x_nhwc.shape
    xp = jnp.pad(x_nhwc, ((0, 0), (1, 1), (1, 1), (0, 0)))
    taps = [xp[:, kh:kh + H, kw:kw + W, :] for kh in range(3) for kw in range(3)]
    return jnp.concatenate(taps, axis=-1).reshape(B, H * W, 9 * C)


def encoder_cnn_forward(images_nchw, params, *, spatial_tile=1024,
                        core_splits=NUM_CORE_SPLITS):
    B, C, H, W = images_nchw.shape
    HW = H * W
    K = 9 * C
    KP = ((K + LANE - 1) // LANE) * LANE                       # lane-dense contraction

    # bf16 cast BEFORE im2col (halves wrapper relayout bytes), then zero-pad
    # the contraction dim so the kernel sees a clean (.., 128)-lane tile.
    x = jnp.transpose(images_nchw, (0, 2, 3, 1)).astype(jnp.bfloat16)   # NHWC bf16
    patches = _im2col_3x3(x)                                            # (B, HW, 9C)
    patches = jnp.pad(patches, ((0, 0), (0, 0), (0, KP - K)))           # (B, HW, KP)

    w2d = params["conv_w"].reshape(K, -1).astype(jnp.bfloat16)          # (9C, F)
    F = w2d.shape[-1]
    w2d = jnp.pad(w2d, ((0, KP - K), (0, 0)))                           # (KP, F)
    conv_b = params["conv_b"].astype(jnp.float32)                       # (1, F)

    lin_w = params["lin_w"].astype(jnp.float32)                         # (F, E), tiny
    E = lin_w.shape[-1]
    head = jnp.concatenate([params["lin_b"], params["bn_gamma"],
                            params["bn_beta"]], axis=0).astype(jnp.float32)  # (3, E)

    # --- tiling: split HW into core_splits chunks (parallel) x NS tiles (reduction)
    NC = core_splits
    assert HW % NC == 0, "H*W must divide evenly across core splits"
    per_core = HW // NC
    T = max(8, min(spatial_tile, per_core))
    T = math.gcd(T, per_core)                        # T must divide per-core work
    assert T % 8 == 0 and per_core % T == 0, "spatial tile must be 8-aligned divisor"

    def vmem_need(t):
        return (2 * B * t * KP * 2              # double-buffered patch tile (bf16)
                + 2 * (KP * F * 2 + F * 4)      # resident conv weight + bias
                + B * F * 4                     # pool accumulator scratch
                + 2 * B * F * 4)                # partial-sum output block

    budget = 24 * 2**20   # conservative so the same tiling also fits v7x (64 MiB VMEM)
    while T > 8 and vmem_need(T) > budget:
        T = math.gcd(max(8, T // 2), per_core)
    NS = per_core // T
    vmem_limit = int(min(48 * 2**20, max(16 * 2**20, 2 * vmem_need(T))))

    cost = pl.CostEstimate(
        flops=int(2 * B * HW * KP * F),
        transcendentals=0,
        bytes_accessed=int(B * HW * KP * 2 + KP * F * 2 + F * 4 + NC * B * F * 4))

    partial = pl.pallas_call(
        _conv_pool_kernel,
        grid=(NC, NS),
        in_specs=[
            pl.BlockSpec((B, T, KP), lambda c, s: (0, c * NS + s, 0)),  # patch tile
            pl.BlockSpec((KP, F),    lambda c, s: (0, 0)),              # conv weight
            pl.BlockSpec((1, F),     lambda c, s: (0, 0)),              # conv bias
        ],
        out_specs=pl.BlockSpec((None, B, F), lambda c, s: (c, 0, 0)),   # per-core partial
        out_shape=jax.ShapeDtypeStruct((NC, B, F), jnp.float32),
        scratch_shapes=[pltpu.VMEM((B, F), jnp.float32)],
        compiler_params=pltpu.CompilerParams(
            dimension_semantics=("parallel", "arbitrary"),
            vmem_limit_bytes=vmem_limit),
        cost_estimate=cost,
    )(patches, w2d, conv_b)

    head_fn = functools.partial(_head_kernel, inv_hw=1.0 / HW)
    return pl.pallas_call(
        head_fn,
        out_shape=jax.ShapeDtypeStruct((B, E), jnp.float32),
    )(partial, lin_w, head)


# Pure-JAX reference (correctness check; same bf16-conv / f32-head numerics).
def encoder_cnn_ref(images_nchw, params):
    x = jnp.transpose(images_nchw, (0, 2, 3, 1)).astype(jnp.bfloat16)
    conv = lax.conv_general_dilated(
        x, params["conv_w"].astype(jnp.bfloat16),
        window_strides=(1, 1), padding="SAME",
        dimension_numbers=("NHWC", "HWIO", "NHWC"),
        preferred_element_type=jnp.float32)
    conv = jnp.maximum(conv + params["conv_b"].reshape(1, 1, 1, -1), 0.0)
    feats = jnp.mean(conv, axis=(1, 2))
    y = jnp.dot(feats, params["lin_w"].astype(jnp.float32)) + params["lin_b"]
    mu = jnp.mean(y, axis=0, keepdims=True)
    var = jnp.mean((y - mu) ** 2, axis=0, keepdims=True)
    return params["bn_gamma"] * (y - mu) * lax.rsqrt(var + EPS) + params["bn_beta"]


def init_params(key, in_channels, feat_dim, embed_size):
    k1, k2, k3, k4 = jax.random.split(key, 4)
    return {
        # stand-in conv trunk (HWIO)
        "conv_w": 0.1 * jax.random.normal(k1, (3, 3, in_channels, feat_dim), jnp.float32),
        "conv_b": 0.1 * jax.random.normal(k2, (1, feat_dim), jnp.float32),
        # nn.Linear(resnet.fc.in_features, embed_size)  (stored transposed: (F, E))
        "lin_w": 0.1 * jax.random.normal(k3, (feat_dim, embed_size), jnp.float32),
        "lin_b": 0.1 * jax.random.normal(k4, (1, embed_size), jnp.float32),
        # nn.BatchNorm1d(embed_size) default init: gamma=1, beta=0
        "bn_gamma": jnp.ones((1, embed_size), jnp.float32),
        "bn_beta": jnp.zeros((1, embed_size), jnp.float32),
    }


if __name__ == "__main__":
    B, C, H, W = 4, 4, 16, 16      # images (NCHW, as in PyTorch); B>=2 for BatchNorm1d
    FEAT_DIM = 128                 # stands in for resnet.fc.in_features (=2048); lane-dense
    EMBED_SIZE = 32

    key = jax.random.PRNGKey(0)
    kp, kx = jax.random.split(key)
    params = init_params(kp, C, FEAT_DIM, EMBED_SIZE)
    images = jax.random.normal(kx, (B, C, H, W), jnp.float32)

    # small tile at demo shapes so the multi-step accumulation + double-buffered
    # patch pipeline is actually exercised (default spatial_tile=1024 for real sizes)
    out = jax.block_until_ready(encoder_cnn_forward(images, params, spatial_tile=64))
    ref = jax.block_until_ready(encoder_cnn_ref(images, params))

    assert out.shape == (B, EMBED_SIZE) and out.dtype == jnp.float32
    assert bool(jnp.all(jnp.isfinite(out)))
    np.testing.assert_allclose(np.asarray(out), np.asarray(ref), rtol=1e-3, atol=1e-3)

    print("KERNEL_OK")
</pallas_src>

<mosaic_0001>
module attributes {stable_mosaic.version = 11 : i64} {
  func.func @_conv_pool_kernel(%arg0: i32, %arg1: i32, %arg2: memref<4x64x128xbf16, #tpu.memory_space<vmem>>, %arg3: memref<128x128xbf16, #tpu.memory_space<vmem>>, %arg4: memref<1x128xf32, #tpu.memory_space<vmem>>, %arg5: memref<1x4x128xf32, #tpu.memory_space<vmem>>, %arg6: memref<4x128xf32, #tpu.memory_space<vmem>>) attributes {dimension_semantics = [#tpu.dimension_semantics<parallel>, #tpu.dimension_semantics<arbitrary>], iteration_bounds = array<i64: 2, 2>, scalar_prefetch = 0 : i64, scratch_operands = 1 : i64, tpu.core_type = #tpu.core_type<tc>, window_params = [{transform_indices = @transform_0, window_bounds = array<i64: 4, 64, 128>}, {pipeline_mode = #tpu.pipeline_mode<synchronous>, transform_indices = @transform_1, window_bounds = array<i64: 128, 128>}, {pipeline_mode = #tpu.pipeline_mode<synchronous>, transform_indices = @transform_2, window_bounds = array<i64: 1, 128>}, {transform_indices = @transform_3, window_bounds = array<i64: 1, 4, 128>}]} {
    %c0_i32 = arith.constant 0 : i32
    %0 = arith.cmpi eq, %arg1, %c0_i32 : i32
    %1 = arith.extui %0 : i1 to i32
    %c0_i32_0 = arith.constant 0 : i32
    %2 = arith.cmpi ne, %1, %c0_i32_0 : i32
    scf.if %2 {
      %cst_14 = arith.constant 0.000000e+00 : f32
      %20 = vector.broadcast %cst_14 : f32 to vector<4x128xf32>
      %c0_15 = arith.constant 0 : index
      %c0_16 = arith.constant 0 : index
      %21 = vector.load %arg6[%c0_15, %c0_16] : memref<4x128xf32, #tpu.memory_space<vmem>>, vector<4x128xf32>
      tpu.vector_store %arg6[%c0_15, %c0_16], %20 {strides = array<i32>} : memref<4x128xf32, #tpu.memory_space<vmem>>, vector<4x128xf32>,
    } else {
    }
    %c0 = arith.constant 0 : index
    %c0_1 = arith.constant 0 : index
    %c0_2 = arith.constant 0 : index
    %3 = vector.load %arg2[%c0, %c0_1, %c0_2] : memref<4x64x128xbf16, #tpu.memory_space<vmem>>, vector<4x64x128xbf16>
    %4 = vector.shape_cast %3 : vector<4x64x128xbf16> to vector<256x128xbf16>
    %c0_3 = arith.constant 0 : index
    %c0_4 = arith.constant 0 : index
    %5 = vector.load %arg3[%c0_3, %c0_4] : memref<128x128xbf16, #tpu.memory_space<vmem>>, vector<128x128xbf16>
    %cst = arith.constant dense<0.000000e+00> : vector<256x128xf32>
    %6 = tpu.matmul %4, %5, %cst {dimension_numbers = #tpu.dot_dimension_numbers<[1], [0], [0], [1], [0, 0, 1, 1], [], []>} : vector<256x128xbf16>, vector<128x128xbf16>, vector<256x128xf32> -> vector<256x128xf32>
    %c0_5 = arith.constant 0 : index
    %c0_6 = arith.constant 0 : index
    %7 = vector.load %arg4[%c0_5, %c0_6] : memref<1x128xf32, #tpu.memory_space<vmem>>, vector<1x128xf32>
    %8 = vector.broadcast %7 : vector<1x128xf32> to vector<256x128xf32>
    %9 = arith.addf %6, %8 : vector<256x128xf32>
    %cst_7 = arith.constant 0.000000e+00 : f32
    %10 = vector.broadcast %cst_7 : f32 to vector<256x128xf32>
    %11 = arith.maximumf %9, %10 : vector<256x128xf32>
    %c0_8 = arith.constant 0 : index
    %c0_9 = arith.constant 0 : index
    %12 = vector.load %arg6[%c0_8, %c0_9] : memref<4x128xf32, #tpu.memory_space<vmem>>, vector<4x128xf32>
    %13 = vector.shape_cast %11 : vector<256x128xf32> to vector<4x64x128xf32>
    %cst_10 = arith.constant dense<0.000000e+00> : vector<4x128xf32>
    %14 = vector.multi_reduction <add>, %13, %cst_10 [1] : vector<4x64x128xf32> to vector<4x128xf32>
    %15 = arith.addf %12, %14 : vector<4x128xf32>
    %c0_11 = arith.constant 0 : index
    %c0_12 = arith.constant 0 : index
    %16 = vector.load %arg6[%c0_11, %c0_12] : memref<4x128xf32, #tpu.memory_space<vmem>>, vector<4x128xf32>
    tpu.vector_store %arg6[%c0_11, %c0_12], %15 {strides = array<i32>} : memref<4x128xf32, #tpu.memory_space<vmem>>, vector<4x128xf32>,
    %c1_i32 = arith.constant 1 : i32
    %17 = arith.cmpi eq, %arg1, %c1_i32 : i32
    %18 = arith.extui %17 : i1 to i32
    %c0_i32_13 = arith.constant 0 : i32
    %19 = arith.cmpi ne, %18, %c0_i32_13 : i32
    scf.if %19 {
      %c0_14 = arith.constant 0 : index
      %c0_15 = arith.constant 0 : index
      %20 = vector.load %arg6[%c0_14, %c0_15] : memref<4x128xf32, #tpu.memory_space<vmem>>, vector<4x128xf32>
      %c0_16 = arith.constant 0 : index
      %c0_17 = arith.constant 0 : index
      %c0_18 = arith.constant 0 : index
      %21 = vector.load %arg5[%c0_16, %c0_17, %c0_18] : memref<1x4x128xf32, #tpu.memory_space<vmem>>, vector<1x4x128xf32>
      %22 = vector.shape_cast %21 : vector<1x4x128xf32> to vector<4x128xf32>
      %23 = vector.shape_cast %20 : vector<4x128xf32> to vector<1x4x128xf32>
      tpu.vector_store %arg5[%c0_16, %c0_17, %c0_18], %23 {strides = array<i32>} : memref<1x4x128xf32, #tpu.memory_space<vmem>>, vector<1x4x128xf32>,
    } else {
    }
    return
  }
  func.func @transform_0(%arg0: i32, %arg1: i32) -> (i32, i32, i32) {
    %c2_i32 = arith.constant 2 : i32
    %0 = arith.muli %arg0, %c2_i32 : i32
    %1 = arith.addi %0, %arg1 : i32
    %c0_i32 = arith.constant 0 : i32
    %c0_i32_0 = arith.constant 0 : i32
    %c0_i32_1 = arith.constant 0 : i32
    return %c0_i32, %1, %c0_i32_0 : i32, i32, i32
  }
  func.func @transform_1(%arg0: i32, %arg1: i32) -> (i32, i32) {
    %c0_i32 = arith.constant 0 : i32
    %c0_i32_0 = arith.constant 0 : i32
    %c0_i32_1 = arith.constant 0 : i32
    return %c0_i32, %c0_i32_0 : i32, i32
  }
  func.func @transform_2(%arg0: i32, %arg1: i32) -> (i32, i32) {
    %c0_i32 = arith.constant 0 : i32
    %c0_i32_0 = arith.constant 0 : i32
    %c0_i32_1 = arith.constant 0 : i32
    return %c0_i32, %c0_i32_0 : i32, i32
  }
  func.func @transform_3(%arg0: i32, %arg1: i32) -> (i32, i32, i32) {
    %c0_i32 = arith.constant 0 : i32
    %c0_i32_0 = arith.constant 0 : i32
    %c0_i32_1 = arith.constant 0 : i32
    return %arg0, %c0_i32, %c0_i32_0 : i32, i32, i32
  }
}

</mosaic_0001>

<llo_original>
// kernel: tpu_custom_call.1
$region0: #{tpu_custom_call.1}
  #allocation0 [shape = 'u32[]', space=smem, size = 0x4, offset = 0x4, fixed_abs, tag = 'smem constant byte address 0x4 - core index']
  #allocation1 [shape = 'u32[144,128]{1,0:T(1,128)}', space=vmem, size = 0x12000, scoped, tag = 'internal scratch']
  #allocation2 [shape = 'f32[4,128]{1,0:T(4,128)}', space=vmem, size = 0x800, scoped, tag = 'scratch operand']
  #allocation9 [shape = 's32[]', space=sflag, size = 0x4, offset = 0, fixed_abs, tag = 'sflag constant byte address 0x0 - dummy sync flag']
  %s0 = inlined_call_operand.hbm [shape: bf16[4,256,128], index: 0, kind: input, shape index: {}]
  %s1 = inlined_call_operand.hbm [shape: bf16[128,128], index: 1, kind: input, shape index: {}]
  %s2 = inlined_call_operand.vmem [shape: f32[1,128], index: 2, kind: input, shape index: {}]
  %s3 = inlined_call_operand.hbm [shape: f32[2,4,128], index: 3, kind: output, shape index: {}]
  %s4 = sld [smem:[#allocation0]]
  $region61: #{tpu_custom_call.1} parent=0
    _
  %s6 = ssub.s32 1, %s4
  %s7 = scalar_select 0, %s6, %s4
  $region1: #{tpu_custom_call.1} parent=0
    #allocation3 [shape = 'u8[131072]{0}', space=vmem, size = 0x20000, scoped, tag = 'input window, operand 0']
    #allocation4 [shape = 's32[2]{0}', space=sflag, size = 0x8, scoped, tag = 'scoped memory for tpu_custom_call.1']
    #allocation5 [shape = 's32[2]{0}', space=sflag, size = 0x8, scoped, tag = 'scoped memory for tpu_custom_call.1']
    #allocation6 [shape = 'u8[32768]{0}', space=vmem, size = 0x8000, scoped, tag = 'input window, operand 1, single buffered']
    #allocation7 [shape = 's32[1]{0}', space=sflag, size = 0x4, scoped, tag = 'scoped memory for tpu_custom_call.1']
    #allocation8 [shape = 'u8[4096]{0}', space=vmem, size = 0x1000, scoped, tag = 'output window, operand 0']
    %8 = vsyncpa [#allocation4], 0
    %s9 = scalar_lea.sflag [#allocation4], 1
    %10 = vsyncpa %s9, 0
    %11 = vsyncpa [#allocation7], 0
    %12 = vsyncpa [#allocation5], 0
    %s13 = scalar_lea.sflag [#allocation5], 1
    %14 = vsyncpa %s13, 0
    loop: start=0, step=1, limit=6
    $region2: #{tpu_custom_call.1} parent=1 // loop_pre_header
      _
    $region3: #{tpu_custom_call.1} parent=1 // loop_header
      %s16 = sphi 0, %s20
      %p17 = scmp.ge.s32.totalorder %s16, 6
      %s23 = sphi 0, %s35
      %s24 = sphi 0, %s31
      %s25 = sphi 0, %s23
      %s26 = sphi 0, %s24
      %s27 = sphi 0, %s25
      %s28 = sphi 0, %s26
      %s42 = sphi 0, %s44
      %s45 = sphi 0, %s42
      %s46 = sphi 0, %s45
      %s62 = sphi 0, %s46
      %s66 = sphi 0, %s66
      %s68 = sphi 0, %s66
      %s69 = sphi 0, %s68
      %s83 = sphi 0, %s69
      %s87 = sphi 0, %s87
      %s89 = sphi 0, %s87
      %s90 = sphi 0, %s89
      %s104 = sphi 0, %s90
      %s110 = sphi 0, %s112
      %s113 = sphi 0, %s110
      %s114 = sphi 0, %s113
      %s130 = sphi 0, %s114
    $region4: #{tpu_custom_call.1} parent=1 // loop_header_branch
      %19 = sbr.rel (%p17) target = $region8
    $region5: #{tpu_custom_call.1} parent=1 // loop_body
      %s21 = ssub.s32 %s16, 1
      %s22 = ssub.s32 %s16, 2
      %s29 = sadd.s32 1, %s24
      %p30 = scmp.ge.s32.totalorder %s29, 2
      %s31 = scalar_select %p30, 0, %s29
      %s32 = sadd.s32 1, %s23
      %s33 = scalar_select %p30, %s32, %s23
      %p34 = scmp.ge.s32.totalorder %s33, 2
      %s35 = scalar_select %p34, 0, %s33
      %s36 = smul.u32 %s23, 2
      %s37 = sadd.s32 %s36, %s24
      %s38 = smul.u32 %s35, 2
      %s39 = sadd.s32 %s38, %s31
      %s40 = ssub.s32 %s37, %s39
      %p41 = scmp.eq.s32.totalorder %s40, 0
      %s43 = sadd.s32 %s42, 1
      %s44 = scalar_select %p41, %s42, %s43
      %p47 = pneg %p41
      %p48 = scmp.eq.s32.totalorder %s16, 3
      %p49 = por %p47, %p48
      %p50 = scmp.ne.s32.totalorder %s42, %s45
      %p51 = scmp.eq.s32.totalorder %s16, 0
      %p52 = por %p50, %p51
      %p53 = scmp.ne.s32.totalorder %s42, %s45
      %p54 = scmp.eq.s32.totalorder %s21, 3
      %p55 = por %p53, %p54
      %p56 = scmp.ne.s32.totalorder %s45, %s46
      %p57 = scmp.eq.s32.totalorder %s21, 0
      %p58 = por %p56, %p57
      %p59 = scmp.ne.s32.totalorder %s45, %s46
      %p60 = scmp.eq.s32.totalorder %s22, 3
      %p61 = por %p59, %p60
      %p63 = scmp.ne.s32.totalorder %s46, %s62
      %p64 = scmp.eq.s32.totalorder %s22, 0
      %p65 = por %p63, %p64
      %s67 = sadd.s32 %s66, 1
      %p70 = scmp.eq.s32.totalorder %s16, 3
      %p71 = scmp.ne.s32.totalorder %s66, %s68
      %p72 = scmp.eq.s32.totalorder %s16, 0
      %p73 = por %p71, %p72
      %p74 = scmp.ne.s32.totalorder %s66, %s68
      %p75 = scmp.eq.s32.totalorder %s21, 3
      %p76 = por %p74, %p75
      %p77 = scmp.ne.s32.totalorder %s68, %s69
      %p78 = scmp.eq.s32.totalorder %s21, 0
      %p79 = por %p77, %p78
      %p80 = scmp.ne.s32.totalorder %s68, %s69
      %p81 = scmp.eq.s32.totalorder %s22, 3
      %p82 = por %p80, %p81
      %p84 = scmp.ne.s32.totalorder %s69, %s83
      %p85 = scmp.eq.s32.totalorder %s22, 0
      %p86 = por %p84, %p85
      %s88 = sadd.s32 %s87, 1
      %p91 = scmp.eq.s32.totalorder %s16, 3
      %p92 = scmp.ne.s32.totalorder %s87, %s89
      %p93 = scmp.eq.s32.totalorder %s16, 0
      %p94 = por %p92, %p93
      %p95 = scmp.ne.s32.totalorder %s87, %s89
      %p96 = scmp.eq.s32.totalorder %s21, 3
      %p97 = por %p95, %p96
      %p98 = scmp.ne.s32.totalorder %s89, %s90
      %p99 = scmp.eq.s32.totalorder %s21, 0
      %p100 = por %p98, %p99
      %p101 = scmp.ne.s32.totalorder %s89, %s90
      %p102 = scmp.eq.s32.totalorder %s22, 3
      %p103 = por %p101, %p102
      %p105 = scmp.ne.s32.totalorder %s90, %s104
      %p106 = scmp.eq.s32.totalorder %s22, 0
      %p107 = por %p105, %p106
      %s108 = ssub.s32 %s23, %s35
      %p109 = scmp.eq.s32.totalorder %s108, 0
      %s111 = sadd.s32 %s110, 1
      %s112 = scalar_select %p109, %s110, %s111
      %p115 = pneg %p109
      %p116 = scmp.eq.s32.totalorder %s16, 3
      %p117 = por %p115, %p116
      %p118 = scmp.ne.s32.totalorder %s110, %s113
      %p119 = scmp.eq.s32.totalorder %s16, 0
      %p120 = por %p118, %p119
      %p121 = scmp.ne.s32.totalorder %s110, %s113
      %p122 = scmp.eq.s32.totalorder %s21, 3
      %p123 = por %p121, %p122
      %p124 = scmp.ne.s32.totalorder %s113, %s114
      %p125 = scmp.eq.s32.totalorder %s21, 0
      %p126 = por %p124, %p125
      %p127 = scmp.ne.s32.totalorder %s113, %s114
      %p128 = scmp.eq.s32.totalorder %s22, 3
      %p129 = por %p127, %p128
      %p131 = scmp.ne.s32.totalorder %s114, %s130
      %p132 = scmp.eq.s32.totalorder %s22, 0
      %p133 = por %p131, %p132
      %p134 = scmp.le.s32.totalorder 1, %s16
      %p135 = scmp.lt.s32.totalorder %s16, 5
      %p136 = pnand %p134, %p135
      %p137 = pneg %p136
      // Predicated region
      $region9: #{tpu_custom_call.1} parent=5 // pred_check
        _
      $region10: #{tpu_custom_call.1} parent=5 // pred_check_branch
        %139 = sbr.rel (%p136) target = $region12
      $region11: #{tpu_custom_call.1} parent=5 // pred_region
        %s140 = ssub.s32 %s16, 1
        // Predicated region
        $region13: #{tpu_custom_call.1} parent=11 // pred_check
          %p141 = pneg %p79
        $region14: #{tpu_custom_call.1} parent=11 // pred_check_branch
          %143 = sbr.rel (%p141) target = $region16
        $region15: #{tpu_custom_call.1} parent=11 // pred_region
          %s145 = ssub.s32 1024, 1024
          %146 = vsyncadd [#allocation7], %s145
          %s147 = sshll.u32 [#allocation6], 4
          %s148 = int_to_ptr.vmem [resolvable:$true] %s147
          %153 = dma.hbm_to_vmem [thread:$0]  %s1, 1024, %s148, [#allocation7], 64, 64, 4
        $region16: #{tpu_custom_call.1} parent=11 // pred_fallthru
          _
        // Predicated region
        $region17: #{tpu_custom_call.1} parent=11 // pred_check
          %p154 = pneg %p100
        $region18: #{tpu_custom_call.1} parent=11 // pred_check_branch
          %156 = sbr.rel (%p154) target = $region20
        $region19: #{tpu_custom_call.1} parent=11 // pred_region
          _
        $region20: #{tpu_custom_call.1} parent=11 // pred_fallthru
          _
      $region12: #{tpu_custom_call.1} parent=5 // pred_fallthru
        _
      %p157 = scmp.lt.s32.totalorder %s16, 4
      // Predicated region
      $region21: #{tpu_custom_call.1} parent=5 // pred_check
        %p158 = pneg %p157
      $region22: #{tpu_custom_call.1} parent=5 // pred_check_branch
        %160 = sbr.rel (%p158) target = $region24
      $region23: #{tpu_custom_call.1} parent=5 // pred_region
        // Predicated region
        $region25: #{tpu_custom_call.1} parent=23 // pred_check
          %p161 = pneg %p52
        $region26: #{tpu_custom_call.1} parent=23 // pred_check_branch
          %163 = sbr.rel (%p161) target = $region28
        $region27: #{tpu_custom_call.1} parent=23 // pred_region
          #allocation10 [shape = 'u32[6]{0}', space=smem, size = 0x18, scoped, tag = 'DMA stride descriptor']
          %s164 = sand.u32 %s42, 1
          %s165 = scalar_lea.sflag [#allocation4], %s164
          %s166 = sand.u32 %s42, 1
          %s167 = smul.addr %s166, 128
          %s168 = scalar_lea.vmem [#allocation3], %s167
          %s169 = smul.u32 %s23, 2
          %s170 = sadd.s32 %s169, %s24
          %s171 = smul.u32 8, %s170
          %s173 = ssub.s32 2048, 2048
          %174 = vsyncadd %s165, %s173
          %s175 = smul.addr %s171, 64
          %s176 = scalar_lea.hbm %s0, %s175
          %s178 = sshll.u32 1, 14
          %s179 = sxor.u32 4294967295, %s178
          %s181 = sld [smem:[#allocation0]]
          %s182 = sadd.s32 2, %s181
          %s184 = sshll.u32 7, 26
          %s185 = sxor.u32 4294967295, %s184
          %s186 = sand.u32 0, %s185
          %s187 = sshll.u32 %s182, 26
          %s188 = sor.u32 %s186, %s187
          %s189 = sshll.u32 %s168, 4
          %s190 = int_to_ptr.vmem [resolvable:$true] %s189
          %196 = sst [smem:[#allocation10]] 2048
          %s197 = scalar_lea.smem [#allocation10], 1
          %198 = sst [smem:[%s197]] 512
          %s199 = scalar_lea.smem [#allocation10], 2
          %200 = sst [smem:[%s199]] 8
          %s201 = scalar_lea.smem [#allocation10], 3
          %202 = sst [smem:[%s201]] 64
          %s203 = scalar_lea.smem [#allocation10], 4
          %204 = sst [smem:[%s203]] 64
          %s205 = scalar_lea.smem [#allocation10], 5
          %206 = sst [smem:[%s205]] 4
          %208 = dma.general %s176, 2048, %s190, %s165, 131072, [#allocation10], %s188, 0
        $region28: #{tpu_custom_call.1} parent=23 // pred_fallthru
          _
      $region24: #{tpu_custom_call.1} parent=5 // pred_fallthru
        _
      %p209 = scmp.le.s32.totalorder 1, %s16
      %p210 = scmp.lt.s32.totalorder %s16, 5
      %p211 = pnand %p209, %p210
      %p212 = pneg %p211
      // Predicated region
      $region29: #{tpu_custom_call.1} parent=5 // pred_check
        _
      $region30: #{tpu_custom_call.1} parent=5 // pred_check_branch
        %214 = sbr.rel (%p211) target = $region32
      $region31: #{tpu_custom_call.1} parent=5 // pred_region
        %s215 = ssub.s32 %s16, 1
        %s216 = sand.u32 %s45, 1
        %s217 = scalar_lea.sflag [#allocation4], %s216
        %s218 = sand.u32 %s45, 1
        %s219 = smul.addr %s218, 128
        %s220 = scalar_lea.vmem [#allocation3], %s219
        // Predicated region
        $region33: #{tpu_custom_call.1} parent=31 // pred_check
          %p221 = pneg %p58
        $region34: #{tpu_custom_call.1} parent=31 // pred_check_branch
          %223 = sbr.rel (%p221) target = $region36
        $region35: #{tpu_custom_call.1} parent=31 // pred_region
          %224 = dma.done %s217, 2048
        $region36: #{tpu_custom_call.1} parent=31 // pred_fallthru
          _
        // Predicated region
        $region37: #{tpu_custom_call.1} parent=31 // pred_check
          %p225 = pneg %p79
        $region38: #{tpu_custom_call.1} parent=31 // pred_check_branch
          %227 = sbr.rel (%p225) target = $region40
        $region39: #{tpu_custom_call.1} parent=31 // pred_region
          %228 = dma.done [#allocation7], 1024
        $region40: #{tpu_custom_call.1} parent=31 // pred_fallthru
          _
        %s229 = sand.u32 %s45, 1
        %s230 = scalar_lea.sflag [#allocation4], %s229
        %s231 = sand.u32 %s45, 1
        %s232 = smul.addr %s231, 128
        %s233 = scalar_lea.vmem [#allocation3], %s232
        %p234 = pneg %p58
        %p235 = pneg %p55
        %p236 = pneg %p79
        %p237 = pneg %p76
        %p238 = pneg %p100
        %p239 = pneg %p97
        %p240 = pneg %p126
        %p241 = pneg %p123
        %s242 = sand.u32 %s113, 1
        %s243 = scalar_lea.sflag [#allocation5], %s242
        %s244 = sand.u32 %s113, 1
        %s245 = smul.addr %s244, 4
        %s246 = scalar_lea.vmem [#allocation8], %s245
        %s247 = smul.u32 %s25, 2
        %s248 = sadd.s32 %s247, %s26
        %s249 = smul.u32 8, %s248
        %p251 = scmp.eq.s32.totalorder %s26, 0
        // Predicated region
        $region41: #{tpu_custom_call.1} parent=31 // pred_check
          %p252 = pneg %p251
        $region42: #{tpu_custom_call.1} parent=31 // pred_check_branch
          %254 = sbr.rel (%p252) target = $region44
        $region43: #{tpu_custom_call.1} parent=31 // pred_region
          %255 = vst [vmem:[#allocation2] sm:$0xf] 0.0
        $region44: #{tpu_custom_call.1} parent=31 // pred_fallthru
          _
        %v256 = vld [vmem:[%s220] sm:$0xf]
        %v257 = vld [vmem:[%s220 + $0x4] sm:$0xf]
        %v258 = vld [vmem:[%s220 + $0x8] sm:$0xf]
        %v259 = vld [vmem:[%s220 + $0xc] sm:$0xf]
        %v260 = vld [vmem:[%s220 + $0x10] sm:$0xf]
        %v261 = vld [vmem:[%s220 + $0x14] sm:$0xf]
        %v262 = vld [vmem:[%s220 + $0x18] sm:$0xf]
        %v263 = vld [vmem:[%s220 + $0x1c] sm:$0xf]
        %v264 = vld [vmem:[%s220 + $0x20] sm:$0xf]
        %v265 = vld [vmem:[%s220 + $0x24] sm:$0xf]
        %v266 = vld [vmem:[%s220 + $0x28] sm:$0xf]
        %v267 = vld [vmem:[%s220 + $0x2c] sm:$0xf]
        %v268 = vld [vmem:[%s220 + $0x30] sm:$0xf]
        %v269 = vld [vmem:[%s220 + $0x34] sm:$0xf]
        %v270 = vld [vmem:[%s220 + $0x38] sm:$0xf]
        %v271 = vld [vmem:[%s220 + $0x3c] sm:$0xf]
        %v272 = vld [vmem:[%s220 + $0x40] sm:$0xf]
        %v273 = vld [vmem:[%s220 + $0x44] sm:$0xf]
        %v274 = vld [vmem:[%s220 + $0x48] sm:$0xf]
        %v275 = vld [vmem:[%s220 + $0x4c] sm:$0xf]
        %v276 = vld [vmem:[%s220 + $0x50] sm:$0xf]
        %v277 = vld [vmem:[%s220 + $0x54] sm:$0xf]
        %v278 = vld [vmem:[%s220 + $0x58] sm:$0xf]
        %v279 = vld [vmem:[%s220 + $0x5c] sm:$0xf]
        %v280 = vld [vmem:[%s220 + $0x60] sm:$0xf]
        %v281 = vld [vmem:[%s220 + $0x64] sm:$0xf]
        %v282 = vld [vmem:[%s220 + $0x68] sm:$0xf]
        %v283 = vld [vmem:[%s220 + $0x6c] sm:$0xf]
        %v284 = vld [vmem:[%s220 + $0x70] sm:$0xf]
        %v285 = vld [vmem:[%s220 + $0x74] sm:$0xf]
        %v286 = vld [vmem:[%s220 + $0x78] sm:$0xf]
        %v287 = vld [vmem:[%s220 + $0x7c] sm:$0xf]
        %v288 = vld [vmem:[#allocation6] sm:$0xf]
        %v289 = vld [vmem:[#allocation6 + $0x4] sm:$0xf]
        %v290 = vld [vmem:[#allocation6 + $0x8] sm:$0xf]
        %v291 = vld [vmem:[#allocation6 + $0xc] sm:$0xf]
        %v292 = vld [vmem:[#allocation6 + $0x10] sm:$0xf]
        %v293 = vld [vmem:[#allocation6 + $0x14] sm:$0xf]
        %v294 = vld [vmem:[#allocation6 + $0x18] sm:$0xf]
        %v295 = vld [vmem:[#allocation6 + $0x1c] sm:$0xf]
        %v296 = vld [vmem:[#allocation6 + $0x20] sm:$0xf]
        %v297 = vld [vmem:[#allocation6 + $0x24] sm:$0xf]
        %v298 = vld [vmem:[#allocation6 + $0x28] sm:$0xf]
        %v299 = vld [vmem:[#allocation6 + $0x2c] sm:$0xf]
        %v300 = vld [vmem:[#allocation6 + $0x30] sm:$0xf]
        %v301 = vld [vmem:[#allocation6 + $0x34] sm:$0xf]
        %v302 = vld [vmem:[#allocation6 + $0x38] sm:$0xf]
        %v303 = vld [vmem:[#allocation6 + $0x3c] sm:$0xf]
        %v304 = vld [vmem:[%s2] sm:$0x1]
        %v306 = vlaneseq
        %v307 = vshrl.u32 %v306, 7
        %v308 = vsub.s32 0, %v307
        %v309 = vrot.slane %v304, %v308
        %v343 = vunpack.c.l.b16 %v256
        %v344 = vunpack.c.l.b16 %v257
        %v345 = vunpack.c.l.b16 %v258
        %v346 = vunpack.c.l.b16 %v259
        %v347 = vunpack.c.l.b16 %v260
        %v348 = vunpack.c.l.b16 %v261
        %v349 = vunpack.c.l.b16 %v262
        %v350 = vunpack.c.l.b16 %v263
        %v351 = vunpack.c.l.b16 %v264
        %v352 = vunpack.c.l.b16 %v265
        %v353 = vunpack.c.l.b16 %v266
        %v354 = vunpack.c.l.b16 %v267
        %v355 = vunpack.c.l.b16 %v268
        %v356 = vunpack.c.l.b16 %v269
        %v357 = vunpack.c.l.b16 %v270
        %v358 = vunpack.c.l.b16 %v271
        %v359 = vunpack.c.l.b16 %v272
        %v360 = vunpack.c.l.b16 %v273
        %v361 = vunpack.c.l.b16 %v274
        %v362 = vunpack.c.l.b16 %v275
        %v363 = vunpack.c.l.b16 %v276
        %v364 = vunpack.c.l.b16 %v277
        %v365 = vunpack.c.l.b16 %v278
        %v366 = vunpack.c.l.b16 %v279
        %v367 = vunpack.c.l.b16 %v280
        %v368 = vunpack.c.l.b16 %v281
        %v369 = vunpack.c.l.b16 %v282
        %v370 = vunpack.c.l.b16 %v283
        %v371 = vunpack.c.l.b16 %v284
        %v372 = vunpack.c.l.b16 %v285
        %v373 = vunpack.c.l.b16 %v286
        %v374 = vunpack.c.l.b16 %v287
        %v375 = vpack.c.b16 %v344, %v343
        %v376 = vpack.c.b16 %v346, %v345
        %v377 = vpack.c.b16 %v348, %v347
        %v378 = vpack.c.b16 %v350, %v349
        %v379 = vpack.c.b16 %v352, %v351
        %v380 = vpack.c.b16 %v354, %v353
        %v381 = vpack.c.b16 %v356, %v355
        %v382 = vpack.c.b16 %v358, %v357
        %v383 = vpack.c.b16 %v360, %v359
        %v384 = vpack.c.b16 %v362, %v361
        %v385 = vpack.c.b16 %v364, %v363
        %v386 = vpack.c.b16 %v366, %v365
        %v387 = vpack.c.b16 %v368, %v367
        %v388 = vpack.c.b16 %v370, %v369
        %v389 = vpack.c.b16 %v372, %v371
        %v390 = vpack.c.b16 %v374, %v373
        %v423 = vunpack.c.l.b16 %v288
        %v424 = vunpack.c.l.b16 %v289
        %v425 = vunpack.c.l.b16 %v290
        %v426 = vunpack.c.l.b16 %v291
        %v427 = vunpack.c.l.b16 %v292
        %v428 = vunpack.c.l.b16 %v293
        %v429 = vunpack.c.l.b16 %v294
        %v430 = vunpack.c.l.b16 %v295
        %v431 = vunpack.c.l.b16 %v296
        %v432 = vunpack.c.l.b16 %v297
        %v433 = vunpack.c.l.b16 %v298
        %v434 = vunpack.c.l.b16 %v299
        %v435 = vunpack.c.l.b16 %v300
        %v436 = vunpack.c.l.b16 %v301
        %v437 = vunpack.c.l.b16 %v302
        %v438 = vunpack.c.l.b16 %v303
        %v439 = vpack.c.b16 %v424, %v423
        %v440 = vpack.c.b16 %v426, %v425
        %v441 = vpack.c.b16 %v428, %v427
        %v442 = vpack.c.b16 %v430, %v429
        %v443 = vpack.c.b16 %v432, %v431
        %v444 = vpack.c.b16 %v434, %v433
        %v445 = vpack.c.b16 %v436, %v435
        %v446 = vpack.c.b16 %v438, %v437
        %455 = vmatprep.subr.bf16.mxu0 0
        %456 = vmatpush1.bf16.msra.mxu0 %v446
        %457 = vmatprep.subr.bf16.mxu0 0
        %458 = vmatpush1.bf16.msra.mxu0 %v445
        %459 = vmatprep.subr.bf16.mxu0 0
        %460 = vmatpush1.bf16.msra.mxu0 %v444
        %461 = vmatprep.subr.bf16.mxu0 0
        %462 = vmatpush1.bf16.msra.mxu0 %v443
        %463 = vmatprep.subr.bf16.mxu0 0
        %464 = vmatpush1.bf16.msra.mxu0 %v442
        %465 = vmatprep.subr.bf16.mxu0 0
        %466 = vmatpush1.bf16.msra.mxu0 %v441
        %467 = vmatprep.subr.bf16.mxu0 0
        %468 = vmatpush1.bf16.msra.mxu0 %v440
        %469 = vmatprep.subr.bf16.mxu0 0
        %470 = vmatpush1.bf16.msra.mxu0 %v439
        %471 = vmatprep.subr.bf16.mxu0 0
        %472 = vmatpush2.bf16.msra.mxu0 0
        %473 = vmatprep.subr.bf16.mxu0 0
        %474 = vmatpush2.bf16.msra.mxu0 0
        %475 = vmatprep.subr.bf16.mxu0 0
        %476 = vmatpush2.bf16.msra.mxu0 0
        %477 = vmatprep.subr.bf16.mxu0 0
        %478 = vmatpush2.bf16.msra.mxu0 0
        %479 = vmatprep.subr.bf16.mxu0 0
        %480 = vmatpush2.bf16.msra.mxu0 0
        %481 = vmatprep.subr.bf16.mxu0 0
        %482 = vmatpush2.bf16.msra.mxu0 0
        %483 = vmatprep.subr.bf16.mxu0 0
        %484 = vmatpush2.bf16.msra.mxu0 0
        %485 = vmatprep.subr.bf16.mxu0 0
        %486 = vmatpush2.bf16.msra.mxu0 0
        %487 = vmatprep.mubr.bf16.mxu0 0
        %488 = vmatmul.mubr.bf16.gmra.mxu0 %v375
        %v489 = vpop.f32.mrf.mxu0
        %v490 = vadd.f32 %v309, %v489
        %v491 = vpop.f32.mrf.mxu0
        %v492 = vpop.f32.mrf.mxu0
        %v493 = vadd.f32 %v309, %v492
        %v494 = vpop.f32.mrf.mxu0
        %495 = vmatprep.mubr.bf16.mxu0 0
        %496 = vmatmul.mubr.bf16.gmra.mxu0 %v376
        %v497 = vpop.f32.mrf.mxu0
        %v498 = vadd.f32 %v309, %v497
        %v499 = vpop.f32.mrf.mxu0
        %v500 = vpop.f32.mrf.mxu0
        %v501 = vadd.f32 %v309, %v500
        %v502 = vpop.f32.mrf.mxu0
        %503 = vmatprep.mubr.bf16.mxu0 0
        %504 = vmatmul.mubr.bf16.gmra.mxu0 %v377
        %v505 = vpop.f32.mrf.mxu0
        %v506 = vadd.f32 %v309, %v505
        %v507 = vpop.f32.mrf.mxu0
        %v508 = vpop.f32.mrf.mxu0
        %v509 = vadd.f32 %v309, %v508
        %v510 = vpop.f32.mrf.mxu0
        %511 = vmatprep.mubr.bf16.mxu0 0
        %512 = vmatmul.mubr.bf16.gmra.mxu0 %v378
        %v513 = vpop.f32.mrf.mxu0
        %v514 = vadd.f32 %v309, %v513
        %v515 = vpop.f32.mrf.mxu0
        %v516 = vpop.f32.mrf.mxu0
        %v517 = vadd.f32 %v309, %v516
        %v518 = vpop.f32.mrf.mxu0
        %519 = vmatprep.mubr.bf16.mxu0 0
        %520 = vmatmul.mubr.bf16.gmra.mxu0 %v379
        %v521 = vpop.f32.mrf.mxu0
        %v522 = vadd.f32 %v309, %v521
        %v523 = vpop.f32.mrf.mxu0
        %v524 = vpop.f32.mrf.mxu0
        %v525 = vadd.f32 %v309, %v524
        %v526 = vpop.f32.mrf.mxu0
        %527 = vmatprep.mubr.bf16.mxu0 0
        %528 = vmatmul.mubr.bf16.gmra.mxu0 %v380
        %v529 = vpop.f32.mrf.mxu0
        %v530 = vadd.f32 %v309, %v529
        %v531 = vpop.f32.mrf.mxu0
        %v532 = vpop.f32.mrf.mxu0
        %v533 = vadd.f32 %v309, %v532
        %v534 = vpop.f32.mrf.mxu0
        %535 = vmatprep.mubr.bf16.mxu0 0
        %536 = vmatmul.mubr.bf16.gmra.mxu0 %v381
        %v537 = vpop.f32.mrf.mxu0
        %v538 = vadd.f32 %v309, %v537
        %v539 = vpop.f32.mrf.mxu0
        %v540 = vpop.f32.mrf.mxu0
        %v541 = vadd.f32 %v309, %v540
        %v542 = vpop.f32.mrf.mxu0
        %543 = vmatprep.mubr.bf16.mxu0 0
        %544 = vmatmul.mubr.bf16.gmra.mxu0 %v382
        %v545 = vpop.f32.mrf.mxu0
        %v546 = vadd.f32 %v309, %v545
        %v547 = vpop.f32.mrf.mxu0
        %v548 = vpop.f32.mrf.mxu0
        %v549 = vadd.f32 %v309, %v548
        %v550 = vpop.f32.mrf.mxu0
        %551 = vmatprep.mubr.bf16.mxu0 0
        %552 = vmatmul.mubr.bf16.gmra.mxu0 %v383
        %v553 = vpop.f32.mrf.mxu0
        %v554 = vadd.f32 %v309, %v553
        %v555 = vpop.f32.mrf.mxu0
        %v556 = vpop.f32.mrf.mxu0
        %v557 = vadd.f32 %v309, %v556
        %v558 = vpop.f32.mrf.mxu0
        %559 = vmatprep.mubr.bf16.mxu0 0
        %560 = vmatmul.mubr.bf16.gmra.mxu0 %v384
        %v561 = vpop.f32.mrf.mxu0
        %v562 = vadd.f32 %v309, %v561
        %v563 = vpop.f32.mrf.mxu0
        %v564 = vpop.f32.mrf.mxu0
        %v565 = vadd.f32 %v309, %v564
        %v566 = vpop.f32.mrf.mxu0
        %567 = vmatprep.mubr.bf16.mxu0 0
        %568 = vmatmul.mubr.bf16.gmra.mxu0 %v385
        %v569 = vpop.f32.mrf.mxu0
        %v570 = vadd.f32 %v309, %v569
        %v571 = vpop.f32.mrf.mxu0
        %v572 = vpop.f32.mrf.mxu0
        %v573 = vadd.f32 %v309, %v572
        %v574 = vpop.f32.mrf.mxu0
        %575 = vmatprep.mubr.bf16.mxu0 0
        %576 = vmatmul.mubr.bf16.gmra.mxu0 %v386
        %v577 = vpop.f32.mrf.mxu0
        %v578 = vadd.f32 %v309, %v577
        %v579 = vpop.f32.mrf.mxu0
        %v580 = vpop.f32.mrf.mxu0
        %v581 = vadd.f32 %v309, %v580
        %v582 = vpop.f32.mrf.mxu0
        %583 = vmatprep.mubr.bf16.mxu0 0
        %584 = vmatmul.mubr.bf16.gmra.mxu0 %v387
        %v585 = vpop.f32.mrf.mxu0
        %v586 = vadd.f32 %v309, %v585
        %v587 = vpop.f32.mrf.mxu0
        %v588 = vpop.f32.mrf.mxu0
        %v589 = vadd.f32 %v309, %v588
        %v590 = vpop.f32.mrf.mxu0
        %591 = vmatprep.mubr.bf16.mxu0 0
        %592 = vmatmul.mubr.bf16.gmra.mxu0 %v388
        %v593 = vpop.f32.mrf.mxu0
        %v594 = vadd.f32 %v309, %v593
        %v595 = vpop.f32.mrf.mxu0
        %v596 = vpop.f32.mrf.mxu0
        %v597 = vadd.f32 %v309, %v596
        %v598 = vpop.f32.mrf.mxu0
        %599 = vmatprep.mubr.bf16.mxu0 0
        %600 = vmatmul.mubr.bf16.gmra.mxu0 %v389
        %v601 = vpop.f32.mrf.mxu0
        %v602 = vadd.f32 %v309, %v601
        %v603 = vpop.f32.mrf.mxu0
        %v604 = vpop.f32.mrf.mxu0
        %v605 = vadd.f32 %v309, %v604
        %v606 = vpop.f32.mrf.mxu0
        %607 = vmatprep.mubr.bf16.mxu0 0
        %608 = vmatmul.mubr.bf16.gmra.mxu0 %v390
        %v609 = vpop.f32.mrf.mxu0
        %v610 = vadd.f32 %v309, %v609
        %v611 = vpop.f32.mrf.mxu0
        %v612 = vpop.f32.mrf.mxu0
        %v613 = vadd.f32 %v309, %v612
        %v614 = vpop.f32.mrf.mxu0
        %615 = vdwg.mxu0
        %v616 = vmax.f32 %v490, 0.0
        %v617 = vmax.f32 %v493, 0.0
        %v618 = vmax.f32 %v498, 0.0
        %v619 = vmax.f32 %v501, 0.0
        %v620 = vmax.f32 %v506, 0.0
        %v621 = vmax.f32 %v509, 0.0
        %v622 = vmax.f32 %v514, 0.0
        %v623 = vmax.f32 %v517, 0.0
        %v624 = vmax.f32 %v522, 0.0
        %v625 = vmax.f32 %v525, 0.0
        %v626 = vmax.f32 %v530, 0.0
        %v627 = vmax.f32 %v533, 0.0
        %v628 = vmax.f32 %v538, 0.0
        %v629 = vmax.f32 %v541, 0.0
        %v630 = vmax.f32 %v546, 0.0
        %v631 = vmax.f32 %v549, 0.0
        %v632 = vmax.f32 %v554, 0.0
        %v633 = vmax.f32 %v557, 0.0
        %v634 = vmax.f32 %v562, 0.0
        %v635 = vmax.f32 %v565, 0.0
        %v636 = vmax.f32 %v570, 0.0
        %v637 = vmax.f32 %v573, 0.0
        %v638 = vmax.f32 %v578, 0.0
        %v639 = vmax.f32 %v581, 0.0
        %v640 = vmax.f32 %v586, 0.0
        %v641 = vmax.f32 %v589, 0.0
        %v642 = vmax.f32 %v594, 0.0
        %v643 = vmax.f32 %v597, 0.0
        %v644 = vmax.f32 %v602, 0.0
        %v645 = vmax.f32 %v605, 0.0
        %v646 = vmax.f32 %v610, 0.0
        %v647 = vmax.f32 %v613, 0.0
        %v648 = vld [vmem:[#allocation2] sm:$0xf]
        %v649 = vadd.f32 %v616, %v617
        %v650 = vadd.f32 %v649, %v618
        %v651 = vadd.f32 %v650, %v619
        %v652 = vadd.f32 %v651, %v620
        %v653 = vadd.f32 %v652, %v621
        %v654 = vadd.f32 %v653, %v622
        %v655 = vadd.f32 %v654, %v623
        %v656 = vrot.slane %v655, 4
        %v657 = vadd.f32 %v655, %v656
        %v658 = vrot.slane %v657, 2
        %v659 = vadd.f32 %v657, %v658
        %v660 = vrot.slane %v659, 1
        %v661 = vadd.f32 %v659, %v660
        %v662 = vadd.f32 %v624, %v625
        %v663 = vadd.f32 %v662, %v626
        %v664 = vadd.f32 %v663, %v627
        %v665 = vadd.f32 %v664, %v628
        %v666 = vadd.f32 %v665, %v629
        %v667 = vadd.f32 %v666, %v630
        %v668 = vadd.f32 %v667, %v631
        %v669 = vrot.slane %v668, 4
        %v670 = vadd.f32 %v668, %v669
        %v671 = vrot.slane %v670, 2
        %v672 = vadd.f32 %v670, %v671
        %v673 = vrot.slane %v672, 1
        %v674 = vadd.f32 %v672, %v673
        %v675 = vadd.f32 %v632, %v633
        %v676 = vadd.f32 %v675, %v634
        %v677 = vadd.f32 %v676, %v635
        %v678 = vadd.f32 %v677, %v636
        %v679 = vadd.f32 %v678, %v637
        %v680 = vadd.f32 %v679, %v638
        %v681 = vadd.f32 %v680, %v639
        %v682 = vrot.slane %v681, 4
        %v683 = vadd.f32 %v681, %v682
        %v684 = vrot.slane %v683, 2
        %v685 = vadd.f32 %v683, %v684
        %v686 = vrot.slane %v685, 1
        %v687 = vadd.f32 %v685, %v686
        %v688 = vadd.f32 %v640, %v641
        %v689 = vadd.f32 %v688, %v642
        %v690 = vadd.f32 %v689, %v643
        %v691 = vadd.f32 %v690, %v644
        %v692 = vadd.f32 %v691, %v645
        %v693 = vadd.f32 %v692, %v646
        %v694 = vadd.f32 %v693, %v647
        %v695 = vrot.slane %v694, 4
        %v696 = vadd.f32 %v694, %v695
        %v697 = vrot.slane %v696, 2
        %v698 = vadd.f32 %v696, %v697
        %v699 = vrot.slane %v698, 1
        %v700 = vadd.f32 %v698, %v699
        %vm705 = vcmask 1041409
        %v706 = vsel %vm705, %v674, %v661
        %vm707 = vcmask 1042434
        %v708 = vsel %vm707, %v687, %v706
        %vm709 = vcmask 1043459
        %v710 = vsel %vm709, %v700, %v708
        %v712 = vadd.f32 %v648, %v710
        %713 = vst [vmem:[#allocation2] sm:$0xf] %v712
        %p714 = scmp.eq.s32.totalorder %s26, 1
        // Predicated region
        $region45: #{tpu_custom_call.1} parent=31 // pred_check
          %p715 = pneg %p714
        $region46: #{tpu_custom_call.1} parent=31 // pred_check_branch
          %717 = sbr.rel (%p715) target = $region48
        $region47: #{tpu_custom_call.1} parent=31 // pred_region
          %v718 = vld [vmem:[#allocation2] sm:$0xf]
          %719 = vst [vmem:[%s246] sm:$0xf] %v718
        $region48: #{tpu_custom_call.1} parent=31 // pred_fallthru
          _
        %s720 = sand.u32 %s113, 1
        %s721 = scalar_lea.sflag [#allocation5], %s720
        %s722 = sand.u32 %s113, 1
        %s723 = smul.addr %s722, 4
        %s724 = scalar_lea.vmem [#allocation8], %s723
        // Predicated region
        $region49: #{tpu_custom_call.1} parent=31 // pred_check
          %p725 = pneg %p123
        $region50: #{tpu_custom_call.1} parent=31 // pred_check_branch
          %727 = sbr.rel (%p725) target = $region52
        $region51: #{tpu_custom_call.1} parent=31 // pred_region
          %s729 = ssub.s32 64, 64
          %730 = vsyncadd %s721, %s729
          %s731 = smul.addr %s25, 64
          %s732 = scalar_lea.hbm %s3, %s731
          %s734 = sshll.u32 %s724, 4
          %s735 = int_to_ptr.vmem [resolvable:$true] %s734
          %737 = dma.vmem_to_hbm [thread:$0]  %s735, 64, %s732, %s721
        $region52: #{tpu_custom_call.1} parent=31 // pred_fallthru
          _
      $region32: #{tpu_custom_call.1} parent=5 // pred_fallthru
        _
      %p738 = scmp.le.s32.totalorder 2, %s16
      // Predicated region
      $region53: #{tpu_custom_call.1} parent=5 // pred_check
        %p739 = pneg %p738
      $region54: #{tpu_custom_call.1} parent=5 // pred_check_branch
        %741 = sbr.rel (%p739) target = $region56
      $region55: #{tpu_custom_call.1} parent=5 // pred_region
        %s742 = ssub.s32 %s16, 2
        // Predicated region
        $region57: #{tpu_custom_call.1} parent=55 // pred_check
          %p743 = pneg %p129
        $region58: #{tpu_custom_call.1} parent=55 // pred_check_branch
          %745 = sbr.rel (%p743) target = $region60
        $region59: #{tpu_custom_call.1} parent=55 // pred_region
          %s746 = sand.u32 %s114, 1
          %s747 = scalar_lea.sflag [#allocation5], %s746
          %s748 = sand.u32 %s114, 1
          %s749 = smul.addr %s748, 4
          %s750 = scalar_lea.vmem [#allocation8], %s749
          %751 = dma.done %s747, 64
        $region60: #{tpu_custom_call.1} parent=55 // pred_fallthru
          _
      $region56: #{tpu_custom_call.1} parent=5 // pred_fallthru
        _
    $region6: #{tpu_custom_call.1} parent=1 // loop_footer
      %s20 = sadd.s32 1, %s16
    $region7: #{tpu_custom_call.1} parent=1 // loop_footer_branch
      %15 = sbr.rel target = $region3
    $region8: #{tpu_custom_call.1} parent=1 // loop_exit
      _
    %752 = vsyncpa [#allocation4], 1
    %s753 = scalar_lea.sflag [#allocation4], 1
    %754 = vsyncpa %s753, 1
    %755 = vsyncpa [#allocation7], 1
    %756 = vsyncpa [#allocation5], 1
    %s757 = scalar_lea.sflag [#allocation5], 1
    %758 = vsyncpa %s757, 1

</llo_original>
